<compile_context>
chip_gen: v7x
topology: tpu7x:2x2x1
jax: 0.10.0
libtpu: 0.0.40
codegen_flags: <defaults>
</compile_context>

<pallas_src>
import jax
import jax.numpy as jnp
from jax import lax
from jax.experimental import pallas as pl
from jax.experimental.pallas import tpu as pltpu

LANE = 128
MAX_LANE_WIDTH = 4096            # widest lane-dense slab we build
TARGET_BLOCK_BYTES = 4 << 20     # ~4 MiB per block: 2 in + 2 out buffers = 16 MiB
VMEM_LIMIT_BYTES = 48 << 20      # headroom for pipeline buffers + compiler temps
                                 # (fits v7x 64 MiB / v5e+v6e 128 MiB physical VMEM)


def _bernoulli_dropout_kernel(seed_ref, x_ref, o_ref):
    x = x_ref[...]
    xf = x.astype(jnp.float32)
    shape = x.shape                                   # (block_rows, width)

    # ---- counter-based PRNG (pure integer VALU ops, no hardware PRNG) ----
    # Global element index: independent of how the slab is tiled, so results
    # are deterministic per (seed, element).
    row = lax.broadcasted_iota(jnp.int32, shape, 0)
    col = lax.broadcasted_iota(jnp.int32, shape, 1)
    base = pl.program_id(0) * (shape[0] * shape[1])   # scalar block offset
    idx = (base + row * shape[1] + col).astype(jnp.uint32)

    s = seed_ref[0].astype(jnp.uint32)
    v = idx * jnp.uint32(0x9E3779B9) + s * jnp.uint32(0x85EBCA6B)
    v = v ^ (v >> 16)
    v = v * jnp.uint32(0x7FEB352D)
    v = v ^ (v >> 15)
    v = v * jnp.uint32(0x846CA68B)
    v = v ^ (v >> 16)

    # Uniform in (0, 1): top 24 bits plus half an ulp, so u > 0 strictly.
    u = ((v >> 8).astype(jnp.int32).astype(jnp.float32) + jnp.float32(0.5)) \
        * jnp.float32(1.0 / (1 << 24))

    # keep  <=>  u < sigmoid(x)  <=>  u * (1 + exp(-x)) < 1.
    # u > 0, so even when exp(-x) overflows to +inf (x < ~-88) the comparison
    # yields "drop", which matches sigmoid(x) < 2^-25 <= u exactly.
    e = jnp.exp(-xf)                                  # single EUP op per element
    keep = (u + u * e) < jnp.float32(1.0)

    # Dtype-native select: kept values pass through bit-exactly, dropped -> 0.
    o_ref[...] = jnp.where(keep, x, jnp.zeros_like(x))


def _choose_layout(n: int, itemsize: int):
    """Pick a lane-dense slab (rows, width) and block row count for n elements."""
    # Widen the slab while the data is large enough to fill it (longer DMA runs,
    # unmasked lane-dense stores, shorter grid).
    width = LANE
    while width * 2 <= MAX_LANE_WIDTH and n >= width * 2 * 8:
        width *= 2
    # dtype-aware sublane packing: f32 -> 8, bf16 -> 16, int8/fp8 -> 32
    sub = {4: 8, 2: 16, 1: 32}.get(itemsize, 8)
    # ~TARGET_BLOCK_BYTES per block, rows a multiple of `sub`
    target_rows = max(sub, (TARGET_BLOCK_BYTES // (width * itemsize)) // sub * sub)
    rows_needed = pl.cdiv(n, width)
    rows_aligned = pl.cdiv(rows_needed, sub) * sub
    m = rows_aligned // sub                     # number of sub-row groups
    if rows_aligned <= target_rows:
        # Small/medium input: aim for >= 2 grid steps so v7x's two TensorCores
        # both get work, but only when it costs little/no extra padding.
        if m >= 2 and (m % 2 == 0 or m >= 8):
            block_rows = ((m + 1) // 2) * sub
        else:
            block_rows = rows_aligned
    else:
        block_rows = target_rows
    rows = pl.cdiv(rows_aligned, block_rows) * block_rows
    return rows, width, block_rows


def bernoulli_dropout(x: jax.Array, seed: int = 0) -> jax.Array:
    """x * bernoulli(sigmoid(x)), computed in a Pallas TPU kernel."""
    orig_shape = x.shape
    orig_dtype = x.dtype
    flat = x.reshape(-1)
    n = flat.shape[0]
    itemsize = jnp.dtype(orig_dtype).itemsize

    rows, width, block_rows = _choose_layout(n, itemsize)
    n_pad = rows * width
    if n_pad != n:
        # TODO(synk): ragged sizes still take a pad + slice HBM round-trip;
        # a masked tail block would avoid it.  Skipped entirely when n divides.
        flat = jnp.pad(flat, (0, n_pad - n))
    x2d = flat.reshape(rows, width)

    grid = (rows // block_rows,)
    seed_arr = jnp.asarray([seed], dtype=jnp.int32)

    out2d = pl.pallas_call(
        _bernoulli_dropout_kernel,
        out_shape=jax.ShapeDtypeStruct((rows, width), orig_dtype),
        grid_spec=pltpu.PrefetchScalarGridSpec(
            num_scalar_prefetch=1,
            grid=grid,
            in_specs=[pl.BlockSpec((block_rows, width), lambda i, seed: (i, 0))],
            out_specs=pl.BlockSpec((block_rows, width), lambda i, seed: (i, 0)),
        ),
        compiler_params=pltpu.CompilerParams(
            dimension_semantics=("parallel",),   # lets v7x shard across both TCs
            vmem_limit_bytes=VMEM_LIMIT_BYTES,
        ),
        cost_estimate=pl.CostEstimate(
            flops=20 * n_pad,
            transcendentals=n_pad,
            bytes_accessed=2 * n_pad * itemsize,
        ),
    )(seed_arr, x2d)

    out = out2d.reshape(-1)
    if n_pad != n:
        out = out[:n]
    return out.reshape(orig_shape)


if __name__ == "__main__":
    key = jax.random.PRNGKey(0)
    x = jax.random.normal(key, (2, 4, 16, 16), dtype=jnp.float32)  # NCHW, like the module

    out = jax.block_until_ready(bernoulli_dropout(x, seed=0))

    assert out.shape == x.shape
    assert out.dtype == x.dtype

    # Every output element is either kept exactly (== x) or dropped (== 0).
    kept = out == x
    dropped = out == 0.0
    assert bool(jnp.all(kept | dropped)), "output contains values that are neither x nor 0"

    # Keep rate should track E[sigmoid(x)] (loose bound for 2048 samples).
    keep_frac = float(jnp.mean(kept.astype(jnp.float32)))
    p_mean = float(jnp.mean(jax.nn.sigmoid(x)))
    assert abs(keep_frac - p_mean) < 0.08, (keep_frac, p_mean)

    # Deterministic for a fixed seed.
    out2 = jax.block_until_ready(bernoulli_dropout(x, seed=0))
    assert bool(jnp.all(out == out2)), "not deterministic for a fixed seed"

    print("KERNEL_OK")
</pallas_src>

<mosaic_0001>
module attributes {stable_mosaic.version = 11 : i64} {
  func.func @_bernoulli_dropout_kernel(%arg0: i32, %arg1: memref<1xi32, #tpu.memory_space<smem>>, %arg2: memref<8x256xf32, #tpu.memory_space<vmem>>, %arg3: memref<8x256xf32, #tpu.memory_space<vmem>>) attributes {dimension_semantics = [#tpu.dimension_semantics<parallel>], iteration_bounds = array<i64: 1>, scalar_prefetch = 1 : i64, scratch_operands = 0 : i64, tpu.core_type = #tpu.core_type<tc>, window_params = [{transform_indices = @transform_0, window_bounds = array<i64: 8, 256>}, {transform_indices = @transform_1, window_bounds = array<i64: 8, 256>}]} {
    %c0 = arith.constant 0 : index
    %c0_0 = arith.constant 0 : index
    %0 = vector.load %arg2[%c0, %c0_0] : memref<8x256xf32, #tpu.memory_space<vmem>>, vector<8x256xf32>
    %1 = tpu.iota {dimensions = array<i32: 0>} : vector<8x256xi32>
    %2 = tpu.iota {dimensions = array<i32: 1>} : vector<8x256xi32>
    %c2048_i32 = arith.constant 2048 : i32
    %3 = arith.muli %arg0, %c2048_i32 : i32
    %c256_i32 = arith.constant 256 : i32
    %4 = vector.broadcast %c256_i32 : i32 to vector<8x256xi32>
    %5 = arith.muli %1, %4 : vector<8x256xi32>
    %6 = vector.broadcast %3 : i32 to vector<8x256xi32>
    %7 = arith.addi %6, %5 : vector<8x256xi32>
    %8 = arith.addi %7, %2 : vector<8x256xi32>
    %c0_1 = arith.constant 0 : index
    %9 = memref.load %arg1[%c0_1] : memref<1xi32, #tpu.memory_space<smem>>
    %c-1640531527_i32 = arith.constant -1640531527 : i32
    %10 = vector.broadcast %c-1640531527_i32 : i32 to vector<8x256xi32>
    %11 = arith.muli %8, %10 : vector<8x256xi32>
    %c-2048144789_i32 = arith.constant -2048144789 : i32
    %12 = arith.muli %9, %c-2048144789_i32 : i32
    %13 = vector.broadcast %12 : i32 to vector<8x256xi32>
    %14 = arith.addi %11, %13 : vector<8x256xi32>
    %c16_i32 = arith.constant 16 : i32
    %15 = vector.broadcast %c16_i32 : i32 to vector<8x256xi32>
    %16 = arith.shrui %14, %15 : vector<8x256xi32>
    %17 = arith.xori %14, %16 : vector<8x256xi32>
    %c2146121005_i32 = arith.constant 2146121005 : i32
    %18 = vector.broadcast %c2146121005_i32 : i32 to vector<8x256xi32>
    %19 = arith.muli %17, %18 : vector<8x256xi32>
    %c15_i32 = arith.constant 15 : i32
    %20 = vector.broadcast %c15_i32 : i32 to vector<8x256xi32>
    %21 = arith.shrui %19, %20 : vector<8x256xi32>
    %22 = arith.xori %19, %21 : vector<8x256xi32>
    %c-2073254261_i32 = arith.constant -2073254261 : i32
    %23 = vector.broadcast %c-2073254261_i32 : i32 to vector<8x256xi32>
    %24 = arith.muli %22, %23 : vector<8x256xi32>
    %c16_i32_2 = arith.constant 16 : i32
    %25 = vector.broadcast %c16_i32_2 : i32 to vector<8x256xi32>
    %26 = arith.shrui %24, %25 : vector<8x256xi32>
    %27 = arith.xori %24, %26 : vector<8x256xi32>
    %c8_i32 = arith.constant 8 : i32
    %28 = vector.broadcast %c8_i32 : i32 to vector<8x256xi32>
    %29 = arith.shrui %27, %28 : vector<8x256xi32>
    %30 = arith.sitofp %29 : vector<8x256xi32> to vector<8x256xf32>
    %cst = arith.constant 5.000000e-01 : f32
    %31 = vector.broadcast %cst : f32 to vector<8x256xf32>
    %32 = arith.addf %30, %31 : vector<8x256xf32>
    %cst_3 = arith.constant 5.96046448E-8 : f32
    %33 = vector.broadcast %cst_3 : f32 to vector<8x256xf32>
    %34 = arith.mulf %32, %33 : vector<8x256xf32>
    %cst_4 = arith.constant 0.000000e+00 : f32
    %35 = vector.broadcast %cst_4 : f32 to vector<8x256xf32>
    %36 = arith.subf %35, %0 : vector<8x256xf32>
    %37 = math.exp %36 : vector<8x256xf32>
    %38 = arith.mulf %34, %37 : vector<8x256xf32>
    %39 = arith.addf %34, %38 : vector<8x256xf32>
    %cst_5 = arith.constant 1.000000e+00 : f32
    %40 = vector.broadcast %cst_5 : f32 to vector<8x256xf32>
    %41 = arith.cmpf olt, %39, %40 : vector<8x256xf32>
    %cst_6 = arith.constant 0.000000e+00 : f32
    %42 = vector.broadcast %cst_6 : f32 to vector<8x256xf32>
    %43 = arith.select %41, %0, %42 : vector<8x256xi1>, vector<8x256xf32>
    %c0_7 = arith.constant 0 : index
    %c0_8 = arith.constant 0 : index
    %44 = vector.load %arg3[%c0_7, %c0_8] : memref<8x256xf32, #tpu.memory_space<vmem>>, vector<8x256xf32>
    tpu.vector_store %arg3[%c0_7, %c0_8], %43 {strides = array<i32>} : memref<8x256xf32, #tpu.memory_space<vmem>>, vector<8x256xf32>,
    return
  }
  func.func @transform_0(%arg0: i32, %arg1: memref<1xi32, #tpu.memory_space<smem>>) -> (i32, i32) {
    %c0_i32 = arith.constant 0 : i32
    %c0_i32_0 = arith.constant 0 : i32
    return %arg0, %c0_i32 : i32, i32
  }
  func.func @transform_1(%arg0: i32, %arg1: memref<1xi32, #tpu.memory_space<smem>>) -> (i32, i32) {
    %c0_i32 = arith.constant 0 : i32
    %c0_i32_0 = arith.constant 0 : i32
    return %arg0, %c0_i32 : i32, i32
  }
}

</mosaic_0001>

<llo_original>
// kernel: tpu_custom_call.1
$region0: #{tpu_custom_call.1}
  #allocation0 [shape = 'u32[]', space=smem, size = 0x4, offset = 0x4, fixed_abs, tag = 'smem constant byte address 0x4 - core index']
  #allocation1 [shape = 'u32[144,128]{1,0:T(1,128)}', space=vmem, size = 0x12000, scoped, tag = 'internal scratch']
  #allocation2 [shape = 's32[1]{0}', space=sflag, size = 0x4, scoped, tag = 'scoped memory for tpu_custom_call.1']
  #allocation3 [shape = 's32[1]{0:T(128)S(6)}', space=smem, size = 0x200, scoped, tag = 'prefetched SMEM operand 0']
  %s0 = inlined_call_operand.<no memory space> [shape: s32[1], index: 0, kind: input, shape index: {}]
  %s1 = inlined_call_operand.hbm [shape: f32[8,256], index: 1, kind: input, shape index: {}]
  %s2 = inlined_call_operand.hbm [shape: f32[8,256], index: 2, kind: output, shape index: {}]
  %s3 = sld [smem:[#allocation0]]
  $region18: #{tpu_custom_call.1} parent=0
    _
  %s5 = ssub.s32 1, %s3
  %s6 = scalar_select 0, %s5, %s3
  %7 = sst [smem:[#allocation3]] %s0
  $region1: #{tpu_custom_call.1} parent=0
    #allocation4 [shape = 'u8[8192]{0}', space=vmem, size = 0x2000, scoped, tag = 'input window, operand 1, single buffered']
    #allocation5 [shape = 's32[1]{0}', space=sflag, size = 0x4, scoped, tag = 'scoped memory for tpu_custom_call.1']
    #allocation6 [shape = 's32[1]{0}', space=sflag, size = 0x4, scoped, tag = 'scoped memory for tpu_custom_call.1']
    #allocation7 [shape = 'u8[8192]{0}', space=vmem, size = 0x2000, scoped, tag = 'output window, operand 0, single buffered']
    %8 = vsyncpa [#allocation5], 0
    %9 = vsyncpa [#allocation6], 0
    // Predicated region
    $region2: #{tpu_custom_call.1} parent=1 // pred_check
      _
    $region3: #{tpu_custom_call.1} parent=1 // pred_check_branch
      %11 = sbr.rel (0) target = $region5
    $region4: #{tpu_custom_call.1} parent=1 // pred_region
      %s13 = ssub.s32 256, 256
      %14 = vsyncadd [#allocation5], %s13
      %s16 = sshll.u32 [#allocation4], 4
      %s17 = int_to_ptr.vmem [resolvable:$true] %s16
      %19 = dma.hbm_to_vmem [thread:$0]  %s1, 256, %s17, [#allocation5]
    $region5: #{tpu_custom_call.1} parent=1 // pred_fallthru
      _
    // Predicated region
    $region6: #{tpu_custom_call.1} parent=1 // pred_check
      _
    $region7: #{tpu_custom_call.1} parent=1 // pred_check_branch
      %21 = sbr.rel (0) target = $region9
    $region8: #{tpu_custom_call.1} parent=1 // pred_region
      %22 = dma.done [#allocation5], 256
    $region9: #{tpu_custom_call.1} parent=1 // pred_fallthru
      _
    %v23 = vld [vmem:[#allocation4] sm:$0xff]
    %v24 = vld [vmem:[#allocation4 + $0x8] sm:$0xff]
    %v25 = vlaneseq
    %v26 = vshrl.u32 %v25, 7
    %v27 = vlaneseq
    %v28 = vand.u32 %v27, 127
    %v29 = vadd.s32 %v28, 128
    %s30 = smul.u32 0, 2048
    %v31 = vmul.u32 %v26, 256
    %v32 = vstv %s30
    %v33 = vadd.s32 %v32, %v31
    %v34 = vadd.s32 %v33, %v28
    %v35 = vadd.s32 %v33, %v29
    %s36 = sld [smem:[#allocation3]]
    %v37 = vmul.u32 %v34, 2654435769
    %v38 = vmul.u32 %v35, 2654435769
    %s39 = smul.u32 %s36, 2246822507
    %v40 = vstv %s39
    %v41 = vadd.s32 %v37, %v40
    %v42 = vadd.s32 %v38, %v40
    %v43 = vshrl.u32 %v41, 16
    %v44 = vshrl.u32 %v42, 16
    %v45 = vxor.u32 %v41, %v43
    %v46 = vxor.u32 %v42, %v44
    %v47 = vmul.u32 %v45, 2146121005
    %v48 = vmul.u32 %v46, 2146121005
    %v49 = vshrl.u32 %v47, 15
    %v50 = vshrl.u32 %v48, 15
    %v51 = vxor.u32 %v47, %v49
    %v52 = vxor.u32 %v48, %v50
    %v53 = vmul.u32 %v51, 2221713035
    %v54 = vmul.u32 %v52, 2221713035
    %v55 = vshrl.u32 %v53, 16
    %v56 = vshrl.u32 %v54, 16
    %v57 = vxor.u32 %v53, %v55
    %v58 = vxor.u32 %v54, %v56
    %v59 = vshrl.u32 %v57, 8
    %v60 = vshrl.u32 %v58, 8
    %v61 = vcvt.s32.f32 %v59
    %v62 = vcvt.s32.f32 %v60
    %v63 = vadd.f32 %v61, 0.5
    %v64 = vadd.f32 %v62, 0.5
    %v65 = vmul.f32 %v63, 5.9604645e-08
    %v66 = vmul.f32 %v64, 5.9604645e-08
    %v67 = vsub.f32 0.0, %v23
    %v68 = vsub.f32 0.0, %v24
    %v69 = vmul.f32 %v67, 1.442695
    %v70 = vpow.pop %v69
    %v71 = vmul.f32 %v68, 1.442695
    %v72 = vpow.pop %v71
    %v73 = vmul.f32 %v65, %v70
    %v74 = vmul.f32 %v66, %v72
    %v75 = vadd.f32 %v65, %v73
    %v76 = vadd.f32 %v66, %v74
    %vm77 = vcmp.lt.f32.partialorder %v75, 1.0
    %vm78 = vcmp.lt.f32.partialorder %v76, 1.0
    %v79 = vsel %vm77, %v23, 0.0
    %v80 = vsel %vm78, %v24, 0.0
    %81 = vst [vmem:[#allocation7] sm:$0xff] %v79
    %82 = vst [vmem:[#allocation7 + $0x8] sm:$0xff] %v80
    // Predicated region
    $region10: #{tpu_custom_call.1} parent=1 // pred_check
      _
    $region11: #{tpu_custom_call.1} parent=1 // pred_check_branch
      %84 = sbr.rel (0) target = $region13
    $region12: #{tpu_custom_call.1} parent=1 // pred_region
      %s86 = ssub.s32 256, 256
      %87 = vsyncadd [#allocation6], %s86
      %s89 = sshll.u32 [#allocation7], 4
      %s90 = int_to_ptr.vmem [resolvable:$true] %s89
      %92 = dma.vmem_to_hbm [thread:$0]  %s90, 256, %s2, [#allocation6]
    $region13: #{tpu_custom_call.1} parent=1 // pred_fallthru
      _
    // Predicated region
    $region14: #{tpu_custom_call.1} parent=1 // pred_check
      _
    $region15: #{tpu_custom_call.1} parent=1 // pred_check_branch
      %94 = sbr.rel (0) target = $region17
    $region16: #{tpu_custom_call.1} parent=1 // pred_region
      %95 = dma.done [#allocation6], 256
    $region17: #{tpu_custom_call.1} parent=1 // pred_fallthru
      _
    %96 = vsyncpa [#allocation5], 1
    %97 = vsyncpa [#allocation6], 1

</llo_original>
